<compile_context>
chip_gen: v7x
topology: tpu7x:2x2x1
jax: 0.10.0
libtpu: 0.0.40
codegen_flags: <defaults>
</compile_context>

<pallas_src>
import functools
import re

import jax
import jax.numpy as jnp
from jax.experimental import pallas as pl
from jax.experimental.pallas import tpu as pltpu


def _round_up(v, m):
    return ((v + m - 1) // m) * m


def _cdiv(a, b):
    return (a + b - 1) // b


def _tpu_generation():
    """Best-effort TPU generation from device_kind (e.g. 'TPU v6 lite' -> 6)."""
    try:
        kind = jax.devices()[0].device_kind
    except Exception:
        return None
    m = re.search(r"(\d+)", str(kind))
    return int(m.group(1)) if m else None


def _mlp_kernel(x_ref, w0_ref, b0_ref, wh_ref, bh_ref, wl_ref, bl_ref, o_ref,
                *, num_hide, num_nodes, apply_relu, use_mxu):
    """Whole MLP on one lane-dense batch tile.

    x_ref : (1, B)             batch slab (batch on lanes)
    w0_ref: (H_pad, 1)         first-layer weight column (in_features == 1)
    b0_ref: (H_pad, 1)
    wh_ref: (nh, H_pad, H_pad) hidden weights (PyTorch (out, in) layout)
    bh_ref: (nh, H_pad, 1)
    wl_ref: (H_pad, 1)         last-layer weight row stored as a column
    bl_ref: (1,) in SMEM       last-layer scalar bias
    o_ref : (1, B)
    """
    x = x_ref[...]                                  # (1, B)

    # Layer 0 (in_features == 1): pure VPU broadcast multiply-add, no MXU.
    h = w0_ref[...] * x + b0_ref[...]               # (H_pad, B)

    for li in range(num_hide):                      # static unroll
        w = wh_ref[li]                              # (H_pad, H_pad)
        b = bh_ref[li]                              # (H_pad, 1)
        if use_mxu:
            # MXU matmul: N = batch-tile lanes; rides the vector-extended slot.
            h = jnp.dot(w, h, preferred_element_type=jnp.float32) + b
        else:
            # Tiny net / tiny tile: unrolled VPU FMAs, trimmed to numNodes
            # (padded weight columns/rows are zero, so skipping them is exact).
            acc = jnp.zeros_like(h)
            for k in range(num_nodes):
                acc = acc + w[:, k:k + 1] * h[k:k + 1, :]
            h = acc + b
        if apply_relu:                              # static: numNodes != 1
            h = jnp.maximum(h, 0.0)

    # Last layer (out_features == 1): VPU multiply + sublane (XLU) reduce,
    # scalar bias read straight from SMEM.
    out = jnp.sum(wl_ref[...] * h, axis=0, keepdims=True) + bl_ref[0]
    o_ref[...] = out.astype(o_ref.dtype)


def ext_net_relu_forward(x, weights, biases, *, batch_tile=256 * 1024,
                         hidden_on_mxu=None):
    """x: (N, 1). weights[i]: (out_i, in_i) (PyTorch layout). biases[i]: (out_i,).

    batch_tile is the primary tuning knob (lanes per grid step); it is clamped
    to a per-chip VMEM budget and to keep >= 2 grid steps when N allows.
    """
    n = x.shape[0]
    num_hide = len(weights) - 2
    num_nodes = weights[0].shape[0]
    h_pad = max(8, _round_up(num_nodes, 8))
    nh = max(num_hide, 1)
    # PyTorch gates ReLU on in_features != 1 and out_features != 1 -> hidden
    # layers only, and only when numNodes != 1.
    apply_relu = num_nodes != 1

    # ------------------------------------------------------------------ tiling
    gen = _tpu_generation()
    if gen is None or gen >= 7:
        # v7x: 64 MiB physical VMEM per TC -> stay well under it.
        stream_budget = 40 * 1024 * 1024
        vmem_limit = 56 * 1024 * 1024
    else:
        # v5e / v6e: 128 MiB physical (default scoped limit is much lower).
        stream_budget = 80 * 1024 * 1024
        vmem_limit = 100 * 1024 * 1024

    # Resident (constant index_map) weight slabs are still double-buffered by
    # default; subtract their footprint from the streaming budget.
    resident_bytes = 2 * 4 * (nh * h_pad * h_pad + nh * h_pad + 3 * h_pad + 8)
    stream_budget = max(stream_budget - resident_bytes, 4 * 1024 * 1024)

    # Per-sample VMEM: (1, b) x/out blocks are sublane-padded 8x and
    # double-buffered (2 * 2 * 32 B) + ~4 live (H_pad, b) f32 activation temps.
    per_sample_bytes = 128 + 16 * h_pad
    vmem_cap_tile = max(128, (stream_budget // per_sample_bytes) // 128 * 128)

    n128 = _round_up(n, 128)
    b_tile = min(batch_tile, vmem_cap_tile, n128)
    if n128 >= 256:
        # Keep >= 2 grid steps so the "parallel" axis uses both v7x TensorCores.
        b_tile = min(b_tile, _round_up(_cdiv(n128, 2), 128))
    b_tile = max(128, (b_tile // 128) * 128)
    n_pad = _round_up(n128, b_tile)
    grid = (n_pad // b_tile,)

    if hidden_on_mxu is None:
        hidden_on_mxu = (num_nodes > 1) and (h_pad > 8 or b_tile >= 1024)

    # ------------------------------------------------------------- operands
    # Input as a (1, n_pad) lane-dense slab (batch on the lane axis).
    xp = jnp.zeros((1, n_pad), jnp.float32).at[0, :n].set(
        x[:, 0].astype(jnp.float32))

    # First layer (1 -> numNodes): weight column + bias column.
    w0 = jnp.zeros((h_pad, 1), jnp.float32).at[:num_nodes, 0].set(
        weights[0][:, 0].astype(jnp.float32))
    b0 = jnp.zeros((h_pad, 1), jnp.float32).at[:num_nodes, 0].set(
        biases[0].astype(jnp.float32))

    # Hidden layers packed into one (nh, H_pad, H_pad) slab (+ bias slab).
    wh = jnp.zeros((nh, h_pad, h_pad), jnp.float32)
    bh = jnp.zeros((nh, h_pad, 1), jnp.float32)
    for i in range(num_hide):
        wh = wh.at[i, :num_nodes, :num_nodes].set(
            weights[1 + i].astype(jnp.float32))
        bh = bh.at[i, :num_nodes, 0].set(biases[1 + i].astype(jnp.float32))

    # Last layer (numNodes -> 1): weight row stored as a column, scalar bias.
    wl = jnp.zeros((h_pad, 1), jnp.float32).at[:num_nodes, 0].set(
        weights[-1][0, :].astype(jnp.float32))
    bl = jnp.asarray(biases[-1], jnp.float32).reshape(1)   # -> SMEM scalar

    kernel = functools.partial(_mlp_kernel, num_hide=num_hide,
                               num_nodes=num_nodes, apply_relu=apply_relu,
                               use_mxu=hidden_on_mxu)

    out_padded = pl.pallas_call(
        kernel,
        out_shape=jax.ShapeDtypeStruct((1, n_pad), jnp.float32),
        grid=grid,
        in_specs=[
            pl.BlockSpec((1, b_tile), lambda i: (0, i)),            # x slab
            pl.BlockSpec((h_pad, 1), lambda i: (0, 0)),             # w0
            pl.BlockSpec((h_pad, 1), lambda i: (0, 0)),             # b0
            pl.BlockSpec((nh, h_pad, h_pad), lambda i: (0, 0, 0)),  # hidden W
            pl.BlockSpec((nh, h_pad, 1), lambda i: (0, 0, 0)),      # hidden b
            pl.BlockSpec((h_pad, 1), lambda i: (0, 0)),             # w_last
            pl.BlockSpec(memory_space=pltpu.MemorySpace.SMEM),      # b_last
        ],
        out_specs=pl.BlockSpec((1, b_tile), lambda i: (0, i)),
        compiler_params=pltpu.CompilerParams(
            dimension_semantics=("parallel",),     # megacore sharding on v7x
            vmem_limit_bytes=vmem_limit),
    )(xp, w0, b0, wh, bh, wl, bl)

    return out_padded[0, :n].reshape(n, 1)


def init_params(key, num_hide=1, num_nodes=2):
    """torch.nn.Linear-style init: U[-1/sqrt(fan_in), 1/sqrt(fan_in)]."""
    dims = [(1, num_nodes)] + [(num_nodes, num_nodes)] * num_hide + [(num_nodes, 1)]
    weights, biases = [], []
    for in_f, out_f in dims:
        key, kw, kb = jax.random.split(key, 3)
        bound = 1.0 / (in_f ** 0.5)
        weights.append(jax.random.uniform(kw, (out_f, in_f), jnp.float32, -bound, bound))
        biases.append(jax.random.uniform(kb, (out_f,), jnp.float32, -bound, bound))
    return weights, biases


def reference_forward(x, weights, biases):
    """Plain-JAX reference mirroring the PyTorch forward (incl. ReLU gating)."""
    out = x.astype(jnp.float32)
    for w, b in zip(weights, biases):
        out_f, in_f = w.shape
        out = out @ w.T + b
        if out_f != 1 and in_f != 1:
            out = jnp.maximum(out, 0.0)
    return out


if __name__ == "__main__":
    key = jax.random.PRNGKey(0)
    kx, kp = jax.random.split(key)

    n_samples = 30
    x_small = jnp.sort(
        2.0 * jax.random.uniform(kx, (n_samples,), jnp.float32) - 1.0
    ).reshape(n_samples, 1)

    configs = [
        dict(num_hide=1, num_nodes=2),    # module defaults (VPU hidden path)
        dict(num_hide=2, num_nodes=4),    # deeper/wider, still VPU at tiny batch
        dict(num_hide=1, num_nodes=1),    # degenerate width: PyTorch skips ReLU
        dict(num_hide=2, num_nodes=16),   # wide net: hidden layers on the MXU
    ]
    for cfg in configs:
        kp, kc = jax.random.split(kp)
        weights, biases = init_params(kc, **cfg)
        out = jax.block_until_ready(ext_net_relu_forward(x_small, weights, biases))
        ref = reference_forward(x_small, weights, biases)
        assert out.shape == (n_samples, 1), (cfg, out.shape)
        assert jnp.allclose(out, ref, atol=1e-4, rtol=1e-4), cfg

    # Large batch: exercises big lane tiles, >=2 grid steps, MXU hidden path.
    n_big = 200_007
    kp, kxb, kc = jax.random.split(kp, 3)
    x_big = 2.0 * jax.random.uniform(kxb, (n_big, 1), jnp.float32) - 1.0
    weights, biases = init_params(kc, num_hide=2, num_nodes=4)
    out = jax.block_until_ready(ext_net_relu_forward(x_big, weights, biases))
    ref = reference_forward(x_big, weights, biases)
    assert out.shape == (n_big, 1), out.shape
    assert jnp.allclose(out, ref, atol=1e-4, rtol=1e-4)

    print("KERNEL_OK")
</pallas_src>

<mosaic_0001>
module attributes {stable_mosaic.version = 11 : i64} {
  func.func @_mlp_kernel(%arg0: i32, %arg1: memref<1x128xf32, #tpu.memory_space<vmem>>, %arg2: memref<8x1xf32, #tpu.memory_space<vmem>>, %arg3: memref<8x1xf32, #tpu.memory_space<vmem>>, %arg4: memref<1x8x8xf32, #tpu.memory_space<vmem>>, %arg5: memref<1x8x1xf32, #tpu.memory_space<vmem>>, %arg6: memref<8x1xf32, #tpu.memory_space<vmem>>, %arg7: memref<1xf32, #tpu.memory_space<smem>>, %arg8: memref<1x128xf32, #tpu.memory_space<vmem>>) attributes {dimension_semantics = [#tpu.dimension_semantics<parallel>], iteration_bounds = array<i64: 1>, scalar_prefetch = 0 : i64, scratch_operands = 0 : i64, tpu.core_type = #tpu.core_type<tc>, window_params = [{transform_indices = @transform_0, window_bounds = array<i64: 1, 128>}, {pipeline_mode = #tpu.pipeline_mode<synchronous>, transform_indices = @transform_1, window_bounds = array<i64: 8, 1>}, {pipeline_mode = #tpu.pipeline_mode<synchronous>, transform_indices = @transform_2, window_bounds = array<i64: 8, 1>}, {pipeline_mode = #tpu.pipeline_mode<synchronous>, transform_indices = @transform_3, window_bounds = array<i64: 1, 8, 8>}, {pipeline_mode = #tpu.pipeline_mode<synchronous>, transform_indices = @transform_4, window_bounds = array<i64: 1, 8, 1>}, {pipeline_mode = #tpu.pipeline_mode<synchronous>, transform_indices = @transform_5, window_bounds = array<i64: 8, 1>}, {transform_indices = @transform_6, window_bounds = array<i64: 1>}, {transform_indices = @transform_7, window_bounds = array<i64: 1, 128>}]} {
    %c0 = arith.constant 0 : index
    %c0_0 = arith.constant 0 : index
    %0 = vector.load %arg1[%c0, %c0_0] : memref<1x128xf32, #tpu.memory_space<vmem>>, vector<1x128xf32>
    %c0_1 = arith.constant 0 : index
    %c0_2 = arith.constant 0 : index
    %1 = vector.load %arg2[%c0_1, %c0_2] : memref<8x1xf32, #tpu.memory_space<vmem>>, vector<8x1xf32>
    %2 = vector.broadcast %1 : vector<8x1xf32> to vector<8x128xf32>
    %3 = vector.broadcast %0 : vector<1x128xf32> to vector<8x128xf32>
    %4 = arith.mulf %2, %3 : vector<8x128xf32>
    %c0_3 = arith.constant 0 : index
    %c0_4 = arith.constant 0 : index
    %5 = vector.load %arg3[%c0_3, %c0_4] : memref<8x1xf32, #tpu.memory_space<vmem>>, vector<8x1xf32>
    %6 = vector.broadcast %5 : vector<8x1xf32> to vector<8x128xf32>
    %7 = arith.addf %4, %6 : vector<8x128xf32>
    %c0_5 = arith.constant 0 : index
    %c0_6 = arith.constant 0 : index
    %c0_7 = arith.constant 0 : index
    %8 = vector.load %arg4[%c0_5, %c0_6, %c0_7] : memref<1x8x8xf32, #tpu.memory_space<vmem>>, vector<1x8x8xf32>
    %9 = vector.shape_cast %8 : vector<1x8x8xf32> to vector<8x8xf32>
    %c0_8 = arith.constant 0 : index
    %c0_9 = arith.constant 0 : index
    %c0_10 = arith.constant 0 : index
    %10 = vector.load %arg5[%c0_8, %c0_9, %c0_10] : memref<1x8x1xf32, #tpu.memory_space<vmem>>, vector<1x8x1xf32>
    %11 = vector.shape_cast %10 : vector<1x8x1xf32> to vector<8x1xf32>
    %cst = arith.constant 0.000000e+00 : f32
    %12 = vector.broadcast %cst : f32 to vector<8x128xf32>
    %13 = vector.extract_strided_slice %9 {offsets = [0, 0], sizes = [8, 1], strides = [1, 1]} : vector<8x8xf32> to vector<8x1xf32>
    %14 = vector.extract_strided_slice %7 {offsets = [0, 0], sizes = [1, 128], strides = [1, 1]} : vector<8x128xf32> to vector<1x128xf32>
    %15 = vector.broadcast %13 : vector<8x1xf32> to vector<8x128xf32>
    %16 = vector.broadcast %14 : vector<1x128xf32> to vector<8x128xf32>
    %17 = arith.mulf %15, %16 : vector<8x128xf32>
    %18 = arith.addf %12, %17 : vector<8x128xf32>
    %19 = vector.extract_strided_slice %9 {offsets = [0, 1], sizes = [8, 1], strides = [1, 1]} : vector<8x8xf32> to vector<8x1xf32>
    %20 = vector.extract_strided_slice %7 {offsets = [1, 0], sizes = [1, 128], strides = [1, 1]} : vector<8x128xf32> to vector<1x128xf32>
    %21 = vector.broadcast %19 : vector<8x1xf32> to vector<8x128xf32>
    %22 = vector.broadcast %20 : vector<1x128xf32> to vector<8x128xf32>
    %23 = arith.mulf %21, %22 : vector<8x128xf32>
    %24 = arith.addf %18, %23 : vector<8x128xf32>
    %25 = vector.broadcast %11 : vector<8x1xf32> to vector<8x128xf32>
    %26 = arith.addf %24, %25 : vector<8x128xf32>
    %cst_11 = arith.constant 0.000000e+00 : f32
    %27 = vector.broadcast %cst_11 : f32 to vector<8x128xf32>
    %28 = arith.maximumf %26, %27 : vector<8x128xf32>
    %c0_12 = arith.constant 0 : index
    %c0_13 = arith.constant 0 : index
    %29 = vector.load %arg6[%c0_12, %c0_13] : memref<8x1xf32, #tpu.memory_space<vmem>>, vector<8x1xf32>
    %30 = vector.broadcast %29 : vector<8x1xf32> to vector<8x128xf32>
    %31 = arith.mulf %30, %28 : vector<8x128xf32>
    %cst_14 = arith.constant dense<0.000000e+00> : vector<128xf32>
    %32 = vector.multi_reduction <add>, %31, %cst_14 [0] : vector<8x128xf32> to vector<128xf32>
    %33 = vector.shape_cast %32 : vector<128xf32> to vector<1x128xf32>
    %c0_15 = arith.constant 0 : index
    %34 = memref.load %arg7[%c0_15] : memref<1xf32, #tpu.memory_space<smem>>
    %35 = vector.broadcast %34 : f32 to vector<1x128xf32>
    %36 = arith.addf %33, %35 : vector<1x128xf32>
    %c0_16 = arith.constant 0 : index
    %c0_17 = arith.constant 0 : index
    %37 = vector.load %arg8[%c0_16, %c0_17] : memref<1x128xf32, #tpu.memory_space<vmem>>, vector<1x128xf32>
    tpu.vector_store %arg8[%c0_16, %c0_17], %36 {strides = array<i32>} : memref<1x128xf32, #tpu.memory_space<vmem>>, vector<1x128xf32>,
    return
  }
  func.func @transform_0(%arg0: i32) -> (i32, i32) {
    %c0_i32 = arith.constant 0 : i32
    %c0_i32_0 = arith.constant 0 : i32
    return %c0_i32, %arg0 : i32, i32
  }
  func.func @transform_1(%arg0: i32) -> (i32, i32) {
    %c0_i32 = arith.constant 0 : i32
    %c0_i32_0 = arith.constant 0 : i32
    %c0_i32_1 = arith.constant 0 : i32
    return %c0_i32, %c0_i32_0 : i32, i32
  }
  func.func @transform_2(%arg0: i32) -> (i32, i32) {
    %c0_i32 = arith.constant 0 : i32
    %c0_i32_0 = arith.constant 0 : i32
    %c0_i32_1 = arith.constant 0 : i32
    return %c0_i32, %c0_i32_0 : i32, i32
  }
  func.func @transform_3(%arg0: i32) -> (i32, i32, i32) {
    %c0_i32 = arith.constant 0 : i32
    %c0_i32_0 = arith.constant 0 : i32
    %c0_i32_1 = arith.constant 0 : i32
    %c0_i32_2 = arith.constant 0 : i32
    return %c0_i32, %c0_i32_0, %c0_i32_1 : i32, i32, i32
  }
  func.func @transform_4(%arg0: i32) -> (i32, i32, i32) {
    %c0_i32 = arith.constant 0 : i32
    %c0_i32_0 = arith.constant 0 : i32
    %c0_i32_1 = arith.constant 0 : i32
    %c0_i32_2 = arith.constant 0 : i32
    return %c0_i32, %c0_i32_0, %c0_i32_1 : i32, i32, i32
  }
  func.func @transform_5(%arg0: i32) -> (i32, i32) {
    %c0_i32 = arith.constant 0 : i32
    %c0_i32_0 = arith.constant 0 : i32
    %c0_i32_1 = arith.constant 0 : i32
    return %c0_i32, %c0_i32_0 : i32, i32
  }
  func.func @transform_6(%arg0: i32) -> i32 {
    %c0_i32 = arith.constant 0 : i32
    %c0_i32_0 = arith.constant 0 : i32
    return %c0_i32 : i32
  }
  func.func @transform_7(%arg0: i32) -> (i32, i32) {
    %c0_i32 = arith.constant 0 : i32
    %c0_i32_0 = arith.constant 0 : i32
    return %c0_i32, %arg0 : i32, i32
  }
}

</mosaic_0001>

<llo_original>
// kernel: tpu_custom_call.1
$region0: #{tpu_custom_call.1}
  #allocation0 [shape = 'u32[]', space=smem, size = 0x4, offset = 0x4, fixed_abs, tag = 'smem constant byte address 0x4 - core index']
  #allocation1 [shape = 'u32[144,128]{1,0:T(1,128)}', space=vmem, size = 0x12000, scoped, tag = 'internal scratch']
  #allocation2 [shape = 'f32[1]{0:T(128)S(6)}', space=smem, size = 0x200, scoped, tag = 'scoped memory for tpu_custom_call.1']
  %s0 = inlined_call_operand.vmem [shape: f32[1,128], index: 0, kind: input, shape index: {}]
  %s1 = inlined_call_operand.vmem [shape: f32[8,1], index: 1, kind: input, shape index: {}]
  %s2 = inlined_call_operand.vmem [shape: f32[8,1], index: 2, kind: input, shape index: {}]
  %s3 = inlined_call_operand.vmem [shape: f32[1,8,8], index: 3, kind: input, shape index: {}]
  %s4 = inlined_call_operand.vmem [shape: f32[1,8,1], index: 4, kind: input, shape index: {}]
  %s5 = inlined_call_operand.vmem [shape: f32[8,1], index: 5, kind: input, shape index: {}]
  %s6 = inlined_call_operand.<no memory space> [shape: f32[1], index: 6, kind: input, shape index: {}]
  %s7 = inlined_call_operand.hbm [shape: f32[1,128], index: 7, kind: output, shape index: {}]
  %s8 = sld [smem:[#allocation0]]
  $region38: #{tpu_custom_call.1} parent=0
    _
  %s10 = ssub.s32 1, %s8
  %s11 = scalar_select 0, %s10, %s8
  %12 = sst [smem:[#allocation2]] %s6
  $region1: #{tpu_custom_call.1} parent=0
    #allocation3 [shape = 'u8[512]{0}', space=vmem, size = 0x400, scoped, tag = 'output window, operand 0, single buffered']
    #allocation4 [shape = 's32[1]{0}', space=sflag, size = 0x4, scoped, tag = 'scoped memory for tpu_custom_call.1']
    %13 = vsyncpa [#allocation4], 0
    // Predicated region
    $region2: #{tpu_custom_call.1} parent=1 // pred_check
      _
    $region3: #{tpu_custom_call.1} parent=1 // pred_check_branch
      %15 = sbr.rel (0) target = $region5
    $region4: #{tpu_custom_call.1} parent=1 // pred_region
      _
    $region5: #{tpu_custom_call.1} parent=1 // pred_fallthru
      _
    // Predicated region
    $region6: #{tpu_custom_call.1} parent=1 // pred_check
      _
    $region7: #{tpu_custom_call.1} parent=1 // pred_check_branch
      %17 = sbr.rel (0) target = $region9
    $region8: #{tpu_custom_call.1} parent=1 // pred_region
      _
    $region9: #{tpu_custom_call.1} parent=1 // pred_fallthru
      _
    // Predicated region
    $region10: #{tpu_custom_call.1} parent=1 // pred_check
      _
    $region11: #{tpu_custom_call.1} parent=1 // pred_check_branch
      %19 = sbr.rel (0) target = $region13
    $region12: #{tpu_custom_call.1} parent=1 // pred_region
      _
    $region13: #{tpu_custom_call.1} parent=1 // pred_fallthru
      _
    // Predicated region
    $region14: #{tpu_custom_call.1} parent=1 // pred_check
      _
    $region15: #{tpu_custom_call.1} parent=1 // pred_check_branch
      %21 = sbr.rel (0) target = $region17
    $region16: #{tpu_custom_call.1} parent=1 // pred_region
      _
    $region17: #{tpu_custom_call.1} parent=1 // pred_fallthru
      _
    // Predicated region
    $region18: #{tpu_custom_call.1} parent=1 // pred_check
      _
    $region19: #{tpu_custom_call.1} parent=1 // pred_check_branch
      %23 = sbr.rel (0) target = $region21
    $region20: #{tpu_custom_call.1} parent=1 // pred_region
      _
    $region21: #{tpu_custom_call.1} parent=1 // pred_fallthru
      _
    // Predicated region
    $region22: #{tpu_custom_call.1} parent=1 // pred_check
      _
    $region23: #{tpu_custom_call.1} parent=1 // pred_check_branch
      %25 = sbr.rel (0) target = $region25
    $region24: #{tpu_custom_call.1} parent=1 // pred_region
      _
    $region25: #{tpu_custom_call.1} parent=1 // pred_fallthru
      _
    // Predicated region
    $region26: #{tpu_custom_call.1} parent=1 // pred_check
      _
    $region27: #{tpu_custom_call.1} parent=1 // pred_check_branch
      %27 = sbr.rel (0) target = $region29
    $region28: #{tpu_custom_call.1} parent=1 // pred_region
      _
    $region29: #{tpu_custom_call.1} parent=1 // pred_fallthru
      _
    %v28 = vld [vmem:[%s0] sm:$0x1]
    %v29 = vld [vmem:[%s1] sm:$0xff]
    %31 = vset.pattern.permute.xlu0 0
    %32 = vperm.xlu0 %31, %v29
    %v33 = vpop.permute.xlu0 %32
    %v36 = vlaneseq
    %v37 = vshrl.u32 %v36, 7
    %v38 = vsub.s32 0, %v37
    %v39 = vrot.slane %v28, %v38
    %v41 = vmul.f32 %v33, %v39
    %v42 = vld [vmem:[%s2] sm:$0xff]
    %44 = vset.pattern.permute.xlu0 0
    %45 = vperm.xlu0 %44, %v42
    %v46 = vpop.permute.xlu0 %45
    %v48 = vadd.f32 %v41, %v46
    %v49 = vld [vmem:[%s3] sm:$0xff]
    %v50 = vld [vmem:[%s4] sm:$0xff]
    %52 = vset.pattern.permute.xlu0 0
    %53 = vperm.xlu0 %52, %v49
    %v54 = vpop.permute.xlu0 %53
    %v56 = vlaneseq
    %v57 = vshrl.u32 %v56, 7
    %v58 = vsub.s32 0, %v57
    %v59 = vrot.slane %v48, %v58
    %v60 = vmul.f32 %v54, %v59
    %v61 = vadd.f32 %v60, 0.0
    %62 = vset.pattern.permute.xlu0 1
    %63 = vperm.xlu0 %62, %v49
    %v64 = vpop.permute.xlu0 %63
    %v66 = vlaneseq
    %v67 = vshrl.u32 %v66, 7
    %v68 = vsub.s32 1, %v67
    %v69 = vrot.slane %v48, %v68
    %v70 = vmul.f32 %v64, %v69
    %v71 = vadd.f32 %v61, %v70
    %73 = vset.pattern.permute.xlu0 0
    %74 = vperm.xlu0 %73, %v50
    %v75 = vpop.permute.xlu0 %74
    %v77 = vadd.f32 %v71, %v75
    %v78 = vmax.f32 %v77, 0.0
    %v79 = vld [vmem:[%s5] sm:$0xff]
    %81 = vset.pattern.permute.xlu0 0
    %82 = vperm.xlu0 %81, %v79
    %v83 = vpop.permute.xlu0 %82
    %v85 = vmul.f32 %v83, %v78
    %v86 = vrot.slane %v85, 4
    %v87 = vadd.f32 %v85, %v86
    %v88 = vrot.slane %v87, 2
    %v89 = vadd.f32 %v87, %v88
    %v90 = vrot.slane %v89, 1
    %v91 = vadd.f32 %v89, %v90
    %s92 = sld [smem:[#allocation2]]
    %v93 = vstv %s92
    %v94 = vadd.f32 %v91, %v93
    %95 = vst [vmem:[#allocation3] sm:$0x1] %v94
    // Predicated region
    $region30: #{tpu_custom_call.1} parent=1 // pred_check
      _
    $region31: #{tpu_custom_call.1} parent=1 // pred_check_branch
      %97 = sbr.rel (0) target = $region33
    $region32: #{tpu_custom_call.1} parent=1 // pred_region
      %s99 = ssub.s32 16, 16
      %100 = vsyncadd [#allocation4], %s99
      %s102 = sshll.u32 [#allocation3], 4
      %s103 = int_to_ptr.vmem [resolvable:$true] %s102
      %105 = dma.vmem_to_hbm [thread:$0]  %s103, 16, %s7, [#allocation4]
    $region33: #{tpu_custom_call.1} parent=1 // pred_fallthru
      _
    // Predicated region
    $region34: #{tpu_custom_call.1} parent=1 // pred_check
      _
    $region35: #{tpu_custom_call.1} parent=1 // pred_check_branch
      %107 = sbr.rel (0) target = $region37
    $region36: #{tpu_custom_call.1} parent=1 // pred_region
      %108 = dma.done [#allocation4], 16
    $region37: #{tpu_custom_call.1} parent=1 // pred_fallthru
      _
    %109 = vsyncpa [#allocation4], 1

</llo_original>
